<compile_context>
chip_gen: v7x
topology: tpu7x:2x2x1
jax: 0.10.0
libtpu: 0.0.40
codegen_flags: <defaults>
</compile_context>

<pallas_src>
import jax
import jax.numpy as jnp
from jax.experimental import pallas as pl
from jax.experimental.pallas import tpu as pltpu


def _round_up(x, m):
    return ((x + m - 1) // m) * m


def _layer_kernel(sdst_ref, ssrc_ref, ddst_ref, adj_ref, hd_ref, z_ref, acc_ref):
    j = pl.program_id(1)

    @pl.when(j == 0)
    def _():
        acc_ref[...] = jnp.zeros_like(acc_ref)

    # Edge weights for this (dst, src) tile:
    #   gate score s = s_dst + s_src   (bias already folded into s_dst)
    #   e = tanh(s) * adj              (adj in {0,1} masks non-edges)
    # Degree norm d is folded out of the N^2 loop: the src side lives in
    # hd = d * h (precomputed), the dst side is applied once at finalize.
    e = jnp.tanh(sdst_ref[...] + ssrc_ref[...]) * adj_ref[...].astype(jnp.float32)
    acc_ref[...] += jnp.dot(e, hd_ref[...], preferred_element_type=jnp.float32)

    @pl.when(j == pl.num_programs(1) - 1)
    def _():
        z_ref[...] = (ddst_ref[...] * acc_ref[...]).astype(z_ref.dtype)


def layer_forward(h, d, adj, w_gate, b_gate, *, block_m=256, block_n=512):
    """h: (N, D) f32, d: (N,) f32, adj: (N, N) {0,1}, w_gate: (1, 2D), b_gate: (1,)."""
    N, D = h.shape
    f32 = jnp.float32
    hi = jax.lax.Precision.HIGHEST

    h32 = h.astype(f32)
    d32 = d.reshape(N).astype(f32)
    wd = w_gate[0, :D].astype(f32)
    ws = w_gate[0, D:].astype(f32)

    # Hoist the MXU-hostile (N,D)x(D,1) gate matmuls out of the kernel and
    # fold the gate bias into the dst half. s_src is pre-transposed to a row.
    s_dst = (jnp.dot(h32, wd, precision=hi) + b_gate.astype(f32)[0])[:, None]  # (N, 1)
    s_src = jnp.dot(h32, ws, precision=hi)[None, :]                            # (1, N)

    # Fold the src-side degree norm into the features once (O(N*D)).
    hd = h32 * d32[:, None]          # (N, D)
    d_dst = d32[:, None]             # (N, 1)

    # Tile sizes (last two block dims must be multiples of (8, 128) or full).
    tm = min(block_m, _round_up(N, 128))
    tn = min(block_n, _round_up(N, 128))
    n_dst = _round_up(N, tm)
    n_src = _round_up(N, tn)
    dp = _round_up(D, 128)           # lane-dense output / full MXU width

    # Zero-pad: padded rows/cols have adj == 0 so they contribute nothing,
    # and padded dst rows are sliced off at the end.
    s_dst_p = jnp.zeros((n_dst, 1), f32).at[:N].set(s_dst)
    d_dst_p = jnp.zeros((n_dst, 1), f32).at[:N].set(d_dst)
    s_src_p = jnp.zeros((1, n_src), f32).at[:, :N].set(s_src)
    adj_p = jnp.zeros((n_dst, n_src), jnp.bfloat16).at[:N, :N].set(
        adj.astype(jnp.bfloat16))    # {0,1} exact in bf16; halves the N^2 stream
    hd_p = jnp.zeros((n_src, dp), f32).at[:N, :D].set(hd)

    grid = (n_dst // tm, n_src // tn)

    z_p = pl.pallas_call(
        _layer_kernel,
        out_shape=jax.ShapeDtypeStruct((n_dst, dp), f32),
        grid_spec=pltpu.PrefetchScalarGridSpec(
            num_scalar_prefetch=0,
            grid=grid,
            in_specs=[
                pl.BlockSpec((tm, 1), lambda i, j: (i, 0)),   # s_dst column
                pl.BlockSpec((1, tn), lambda i, j: (0, j)),   # s_src row (pre-transposed)
                pl.BlockSpec((tm, 1), lambda i, j: (i, 0)),   # d_dst column
                pl.BlockSpec((tm, tn), lambda i, j: (i, j)),  # adj tile (bf16 stream)
                pl.BlockSpec((tn, dp), lambda i, j: (j, 0)),  # d-scaled src features
            ],
            out_specs=pl.BlockSpec((tm, dp), lambda i, j: (i, 0)),  # resident across j
            scratch_shapes=[pltpu.VMEM((tm, dp), jnp.float32)],
        ),
        compiler_params=pltpu.CompilerParams(
            dimension_semantics=("parallel", "arbitrary"),
        ),
    )(s_dst_p, s_src_p, d_dst_p, adj_p, hd_p)

    return z_p[:N, :D]


def _reference(h, d, adj, w_gate, b_gate):
    """Faithful dense port of the PyTorch module (eval mode)."""
    D = h.shape[1]
    hi = jax.lax.Precision.HIGHEST
    wd = w_gate[0, :D]
    ws = w_gate[0, D:]
    a = jnp.tanh(jnp.dot(h, wd[:, None], precision=hi)
                 + jnp.dot(h, ws[:, None], precision=hi).T + b_gate[0])
    e = (d[:, None] * d[None, :]) * a * adj
    return jnp.dot(e, h, precision=hi)


if __name__ == "__main__":
    key = jax.random.PRNGKey(0)

    def make_case(k, n, d_feat, density=0.3):
        k1, k2, k3 = jax.random.split(k, 3)
        h = jax.random.normal(k1, (n, d_feat), dtype=jnp.float32)
        # Random directed graph, dense adjacency: adj[v, u] = 1 iff edge u -> v.
        adj = (jax.random.uniform(k2, (n, n)) < density).astype(jnp.float32)
        # Degree-style node normalization d = 1/sqrt(1 + in_degree).
        deg = jnp.sum(adj, axis=1)
        dnorm = 1.0 / jnp.sqrt(1.0 + deg)
        # Gate params: xavier_normal_(gain=1.414) on (1, 2D) weight, zero bias.
        fan_in, fan_out = 2 * d_feat, 1
        std = 1.414 * jnp.sqrt(2.0 / (fan_in + fan_out))
        w_gate = std * jax.random.normal(k3, (1, 2 * d_feat), dtype=jnp.float32)
        b_gate = jnp.zeros((1,), dtype=jnp.float32)
        return h, dnorm, adj, w_gate, b_gate

    k0, k1 = jax.random.split(key)

    # Case 1: small shapes natural to the module (N=16 nodes, in_dim=32).
    h, dnorm, adj, w_gate, b_gate = make_case(k0, 16, 32)
    z = layer_forward(h, dnorm, adj, w_gate, b_gate)
    jax.block_until_ready(z)
    z_ref = _reference(h, dnorm, adj, w_gate, b_gate)
    assert z.shape == (16, 32)
    assert jnp.allclose(z, z_ref, atol=1e-4, rtol=1e-4), \
        float(jnp.max(jnp.abs(z - z_ref)))

    # Case 2: non-tile-aligned shapes with small blocks to exercise the
    # (parallel dst x arbitrary src) grid, the resident accumulator and padding.
    h2, d2, adj2, wg2, bg2 = make_case(k1, 300, 40)
    z2 = layer_forward(h2, d2, adj2, wg2, bg2, block_m=128, block_n=128)
    jax.block_until_ready(z2)
    z2_ref = _reference(h2, d2, adj2, wg2, bg2)
    assert z2.shape == (300, 40)
    assert jnp.allclose(z2, z2_ref, atol=3e-4, rtol=3e-4), \
        float(jnp.max(jnp.abs(z2 - z2_ref)))

    print("KERNEL_OK")
</pallas_src>

<mosaic_0001>
module attributes {stable_mosaic.version = 11 : i64} {
  func.func @_layer_kernel(%arg0: i32, %arg1: i32, %arg2: memref<128x1xf32, #tpu.memory_space<vmem>>, %arg3: memref<1x128xf32, #tpu.memory_space<vmem>>, %arg4: memref<128x1xf32, #tpu.memory_space<vmem>>, %arg5: memref<128x128xbf16, #tpu.memory_space<vmem>>, %arg6: memref<128x128xf32, #tpu.memory_space<vmem>>, %arg7: memref<128x128xf32, #tpu.memory_space<vmem>>, %arg8: memref<128x128xf32, #tpu.memory_space<vmem>>) attributes {dimension_semantics = [#tpu.dimension_semantics<parallel>, #tpu.dimension_semantics<arbitrary>], iteration_bounds = array<i64: 1, 1>, scalar_prefetch = 0 : i64, scratch_operands = 1 : i64, tpu.core_type = #tpu.core_type<tc>, window_params = [{transform_indices = @transform_0, window_bounds = array<i64: 128, 1>}, {transform_indices = @transform_1, window_bounds = array<i64: 1, 128>}, {transform_indices = @transform_2, window_bounds = array<i64: 128, 1>}, {transform_indices = @transform_3, window_bounds = array<i64: 128, 128>}, {transform_indices = @transform_4, window_bounds = array<i64: 128, 128>}, {transform_indices = @transform_5, window_bounds = array<i64: 128, 128>}]} {
    %c0_i32 = arith.constant 0 : i32
    %0 = arith.cmpi eq, %arg1, %c0_i32 : i32
    %1 = arith.extui %0 : i1 to i32
    %c0_i32_0 = arith.constant 0 : i32
    %2 = arith.cmpi ne, %1, %c0_i32_0 : i32
    scf.if %2 {
      %cst_14 = arith.constant 0.000000e+00 : f32
      %20 = vector.broadcast %cst_14 : f32 to vector<128x128xf32>
      %c0_15 = arith.constant 0 : index
      %c0_16 = arith.constant 0 : index
      %21 = vector.load %arg8[%c0_15, %c0_16] : memref<128x128xf32, #tpu.memory_space<vmem>>, vector<128x128xf32>
      tpu.vector_store %arg8[%c0_15, %c0_16], %20 {strides = array<i32>} : memref<128x128xf32, #tpu.memory_space<vmem>>, vector<128x128xf32>,
    } else {
    }
    %c0 = arith.constant 0 : index
    %c0_1 = arith.constant 0 : index
    %3 = vector.load %arg2[%c0, %c0_1] : memref<128x1xf32, #tpu.memory_space<vmem>>, vector<128x1xf32>
    %c0_2 = arith.constant 0 : index
    %c0_3 = arith.constant 0 : index
    %4 = vector.load %arg3[%c0_2, %c0_3] : memref<1x128xf32, #tpu.memory_space<vmem>>, vector<1x128xf32>
    %5 = vector.broadcast %3 : vector<128x1xf32> to vector<128x128xf32>
    %6 = vector.broadcast %4 : vector<1x128xf32> to vector<128x128xf32>
    %7 = arith.addf %5, %6 : vector<128x128xf32>
    %8 = math.tanh %7 : vector<128x128xf32>
    %c0_4 = arith.constant 0 : index
    %c0_5 = arith.constant 0 : index
    %9 = vector.load %arg5[%c0_4, %c0_5] : memref<128x128xbf16, #tpu.memory_space<vmem>>, vector<128x128xbf16>
    %10 = arith.extf %9 : vector<128x128xbf16> to vector<128x128xf32>
    %11 = arith.mulf %8, %10 : vector<128x128xf32>
    %c0_6 = arith.constant 0 : index
    %c0_7 = arith.constant 0 : index
    %12 = vector.load %arg8[%c0_6, %c0_7] : memref<128x128xf32, #tpu.memory_space<vmem>>, vector<128x128xf32>
    %c0_8 = arith.constant 0 : index
    %c0_9 = arith.constant 0 : index
    %13 = vector.load %arg6[%c0_8, %c0_9] : memref<128x128xf32, #tpu.memory_space<vmem>>, vector<128x128xf32>
    %cst = arith.constant dense<0.000000e+00> : vector<128x128xf32>
    %14 = tpu.matmul %11, %13, %cst {dimension_numbers = #tpu.dot_dimension_numbers<[1], [0], [0], [1], [0, 0, 1, 1], [], []>} : vector<128x128xf32>, vector<128x128xf32>, vector<128x128xf32> -> vector<128x128xf32>
    %15 = arith.addf %12, %14 : vector<128x128xf32>
    %c0_10 = arith.constant 0 : index
    %c0_11 = arith.constant 0 : index
    %16 = vector.load %arg8[%c0_10, %c0_11] : memref<128x128xf32, #tpu.memory_space<vmem>>, vector<128x128xf32>
    tpu.vector_store %arg8[%c0_10, %c0_11], %15 {strides = array<i32>} : memref<128x128xf32, #tpu.memory_space<vmem>>, vector<128x128xf32>,
    %c0_i32_12 = arith.constant 0 : i32
    %17 = arith.cmpi eq, %arg1, %c0_i32_12 : i32
    %18 = arith.extui %17 : i1 to i32
    %c0_i32_13 = arith.constant 0 : i32
    %19 = arith.cmpi ne, %18, %c0_i32_13 : i32
    scf.if %19 {
      %c0_14 = arith.constant 0 : index
      %c0_15 = arith.constant 0 : index
      %20 = vector.load %arg4[%c0_14, %c0_15] : memref<128x1xf32, #tpu.memory_space<vmem>>, vector<128x1xf32>
      %c0_16 = arith.constant 0 : index
      %c0_17 = arith.constant 0 : index
      %21 = vector.load %arg8[%c0_16, %c0_17] : memref<128x128xf32, #tpu.memory_space<vmem>>, vector<128x128xf32>
      %22 = vector.broadcast %20 : vector<128x1xf32> to vector<128x128xf32>
      %23 = arith.mulf %22, %21 : vector<128x128xf32>
      %c0_18 = arith.constant 0 : index
      %c0_19 = arith.constant 0 : index
      %24 = vector.load %arg7[%c0_18, %c0_19] : memref<128x128xf32, #tpu.memory_space<vmem>>, vector<128x128xf32>
      tpu.vector_store %arg7[%c0_18, %c0_19], %23 {strides = array<i32>} : memref<128x128xf32, #tpu.memory_space<vmem>>, vector<128x128xf32>,
    } else {
    }
    return
  }
  func.func @transform_0(%arg0: i32, %arg1: i32) -> (i32, i32) {
    %c0_i32 = arith.constant 0 : i32
    %c0_i32_0 = arith.constant 0 : i32
    return %arg0, %c0_i32 : i32, i32
  }
  func.func @transform_1(%arg0: i32, %arg1: i32) -> (i32, i32) {
    %c0_i32 = arith.constant 0 : i32
    %c0_i32_0 = arith.constant 0 : i32
    return %c0_i32, %arg1 : i32, i32
  }
  func.func @transform_2(%arg0: i32, %arg1: i32) -> (i32, i32) {
    %c0_i32 = arith.constant 0 : i32
    %c0_i32_0 = arith.constant 0 : i32
    return %arg0, %c0_i32 : i32, i32
  }
  func.func @transform_3(%arg0: i32, %arg1: i32) -> (i32, i32) {
    %c0_i32 = arith.constant 0 : i32
    return %arg0, %arg1 : i32, i32
  }
  func.func @transform_4(%arg0: i32, %arg1: i32) -> (i32, i32) {
    %c0_i32 = arith.constant 0 : i32
    %c0_i32_0 = arith.constant 0 : i32
    return %arg1, %c0_i32 : i32, i32
  }
  func.func @transform_5(%arg0: i32, %arg1: i32) -> (i32, i32) {
    %c0_i32 = arith.constant 0 : i32
    %c0_i32_0 = arith.constant 0 : i32
    return %arg0, %c0_i32 : i32, i32
  }
}

</mosaic_0001>

<llo_original>
// kernel: tpu_custom_call.1
$region0: #{tpu_custom_call.1}
  #allocation0 [shape = 'u32[]', space=smem, size = 0x4, offset = 0x4, fixed_abs, tag = 'smem constant byte address 0x4 - core index']
  #allocation1 [shape = 'u32[144,128]{1,0:T(1,128)}', space=vmem, size = 0x12000, scoped, tag = 'internal scratch']
  #allocation2 [shape = 'f32[128,128]{1,0:T(8,128)}', space=vmem, size = 0x10000, scoped, tag = 'scratch operand']
  %s0 = inlined_call_operand.vmem [shape: f32[128,1], index: 0, kind: input, shape index: {}]
  %s1 = inlined_call_operand.vmem [shape: f32[1,128], index: 1, kind: input, shape index: {}]
  %s2 = inlined_call_operand.vmem [shape: f32[128,1], index: 2, kind: input, shape index: {}]
  %s3 = inlined_call_operand.vmem [shape: bf16[128,128], index: 3, kind: input, shape index: {}]
  %s4 = inlined_call_operand.vmem [shape: f32[128,128], index: 4, kind: input, shape index: {}]
  %s5 = inlined_call_operand.hbm [shape: f32[128,128], index: 5, kind: output, shape index: {}]
  %s6 = sld [smem:[#allocation0]]
  $region38: #{tpu_custom_call.1} parent=0
    _
  %s8 = ssub.s32 1, %s6
  %s9 = scalar_select 0, %s8, %s6
  $region1: #{tpu_custom_call.1} parent=0
    #allocation3 [shape = 'u8[65536]{0}', space=vmem, size = 0x10000, scoped, tag = 'output window, operand 0, single buffered']
    #allocation4 [shape = 's32[1]{0}', space=sflag, size = 0x4, scoped, tag = 'scoped memory for tpu_custom_call.1']
    %10 = vsyncpa [#allocation4], 0
    // Predicated region
    $region2: #{tpu_custom_call.1} parent=1 // pred_check
      _
    $region3: #{tpu_custom_call.1} parent=1 // pred_check_branch
      %12 = sbr.rel (0) target = $region5
    $region4: #{tpu_custom_call.1} parent=1 // pred_region
      _
    $region5: #{tpu_custom_call.1} parent=1 // pred_fallthru
      _
    // Predicated region
    $region6: #{tpu_custom_call.1} parent=1 // pred_check
      _
    $region7: #{tpu_custom_call.1} parent=1 // pred_check_branch
      %14 = sbr.rel (0) target = $region9
    $region8: #{tpu_custom_call.1} parent=1 // pred_region
      _
    $region9: #{tpu_custom_call.1} parent=1 // pred_fallthru
      _
    // Predicated region
    $region10: #{tpu_custom_call.1} parent=1 // pred_check
      _
    $region11: #{tpu_custom_call.1} parent=1 // pred_check_branch
      %16 = sbr.rel (0) target = $region13
    $region12: #{tpu_custom_call.1} parent=1 // pred_region
      _
    $region13: #{tpu_custom_call.1} parent=1 // pred_fallthru
      _
    // Predicated region
    $region14: #{tpu_custom_call.1} parent=1 // pred_check
      _
    $region15: #{tpu_custom_call.1} parent=1 // pred_check_branch
      %18 = sbr.rel (0) target = $region17
    $region16: #{tpu_custom_call.1} parent=1 // pred_region
      _
    $region17: #{tpu_custom_call.1} parent=1 // pred_fallthru
      _
    // Predicated region
    $region18: #{tpu_custom_call.1} parent=1 // pred_check
      _
    $region19: #{tpu_custom_call.1} parent=1 // pred_check_branch
      %20 = sbr.rel (0) target = $region21
    $region20: #{tpu_custom_call.1} parent=1 // pred_region
      _
    $region21: #{tpu_custom_call.1} parent=1 // pred_fallthru
      _
    %p21 = scmp.eq.s32.totalorder 0, 0
    // Predicated region
    $region22: #{tpu_custom_call.1} parent=1 // pred_check
      %p22 = pneg %p21
    $region23: #{tpu_custom_call.1} parent=1 // pred_check_branch
      %24 = sbr.rel (%p22) target = $region25
    $region24: #{tpu_custom_call.1} parent=1 // pred_region
      %25 = vst [vmem:[#allocation2] sm:$0xff] 0.0
      %26 = vst [vmem:[#allocation2 + $0x8] sm:$0xff] 0.0
      %27 = vst [vmem:[#allocation2 + $0x10] sm:$0xff] 0.0
      %28 = vst [vmem:[#allocation2 + $0x18] sm:$0xff] 0.0
      %29 = vst [vmem:[#allocation2 + $0x20] sm:$0xff] 0.0
      %30 = vst [vmem:[#allocation2 + $0x28] sm:$0xff] 0.0
      %31 = vst [vmem:[#allocation2 + $0x30] sm:$0xff] 0.0
      %32 = vst [vmem:[#allocation2 + $0x38] sm:$0xff] 0.0
      %33 = vst [vmem:[#allocation2 + $0x40] sm:$0xff] 0.0
      %34 = vst [vmem:[#allocation2 + $0x48] sm:$0xff] 0.0
      %35 = vst [vmem:[#allocation2 + $0x50] sm:$0xff] 0.0
      %36 = vst [vmem:[#allocation2 + $0x58] sm:$0xff] 0.0
      %37 = vst [vmem:[#allocation2 + $0x60] sm:$0xff] 0.0
      %38 = vst [vmem:[#allocation2 + $0x68] sm:$0xff] 0.0
      %39 = vst [vmem:[#allocation2 + $0x70] sm:$0xff] 0.0
      %40 = vst [vmem:[#allocation2 + $0x78] sm:$0xff] 0.0
    $region25: #{tpu_custom_call.1} parent=1 // pred_fallthru
      _
    %v41 = vld [vmem:[%s0] sm:$0xff]
    %v42 = vld [vmem:[%s0 + $0x8] sm:$0xff]
    %v43 = vld [vmem:[%s0 + $0x10] sm:$0xff]
    %v44 = vld [vmem:[%s0 + $0x18] sm:$0xff]
    %v45 = vld [vmem:[%s0 + $0x20] sm:$0xff]
    %v46 = vld [vmem:[%s0 + $0x28] sm:$0xff]
    %v47 = vld [vmem:[%s0 + $0x30] sm:$0xff]
    %v48 = vld [vmem:[%s0 + $0x38] sm:$0xff]
    %v49 = vld [vmem:[%s0 + $0x40] sm:$0xff]
    %v50 = vld [vmem:[%s0 + $0x48] sm:$0xff]
    %v51 = vld [vmem:[%s0 + $0x50] sm:$0xff]
    %v52 = vld [vmem:[%s0 + $0x58] sm:$0xff]
    %v53 = vld [vmem:[%s0 + $0x60] sm:$0xff]
    %v54 = vld [vmem:[%s0 + $0x68] sm:$0xff]
    %v55 = vld [vmem:[%s0 + $0x70] sm:$0xff]
    %v56 = vld [vmem:[%s0 + $0x78] sm:$0xff]
    %v57 = vld [vmem:[%s1] sm:$0x1]
    %59 = vset.pattern.permute.xlu0 0
    %60 = vperm.xlu0 %59, %v41
    %v61 = vpop.permute.xlu0 %60
    %64 = vset.pattern.permute.xlu0 0
    %65 = vperm.xlu0 %64, %v42
    %v66 = vpop.permute.xlu0 %65
    %69 = vset.pattern.permute.xlu0 0
    %70 = vperm.xlu0 %69, %v43
    %v71 = vpop.permute.xlu0 %70
    %74 = vset.pattern.permute.xlu0 0
    %75 = vperm.xlu0 %74, %v44
    %v76 = vpop.permute.xlu0 %75
    %79 = vset.pattern.permute.xlu0 0
    %80 = vperm.xlu0 %79, %v45
    %v81 = vpop.permute.xlu0 %80
    %84 = vset.pattern.permute.xlu0 0
    %85 = vperm.xlu0 %84, %v46
    %v86 = vpop.permute.xlu0 %85
    %89 = vset.pattern.permute.xlu0 0
    %90 = vperm.xlu0 %89, %v47
    %v91 = vpop.permute.xlu0 %90
    %94 = vset.pattern.permute.xlu0 0
    %95 = vperm.xlu0 %94, %v48
    %v96 = vpop.permute.xlu0 %95
    %99 = vset.pattern.permute.xlu0 0
    %100 = vperm.xlu0 %99, %v49
    %v101 = vpop.permute.xlu0 %100
    %104 = vset.pattern.permute.xlu0 0
    %105 = vperm.xlu0 %104, %v50
    %v106 = vpop.permute.xlu0 %105
    %109 = vset.pattern.permute.xlu0 0
    %110 = vperm.xlu0 %109, %v51
    %v111 = vpop.permute.xlu0 %110
    %114 = vset.pattern.permute.xlu0 0
    %115 = vperm.xlu0 %114, %v52
    %v116 = vpop.permute.xlu0 %115
    %119 = vset.pattern.permute.xlu0 0
    %120 = vperm.xlu0 %119, %v53
    %v121 = vpop.permute.xlu0 %120
    %124 = vset.pattern.permute.xlu0 0
    %125 = vperm.xlu0 %124, %v54
    %v126 = vpop.permute.xlu0 %125
    %129 = vset.pattern.permute.xlu0 0
    %130 = vperm.xlu0 %129, %v55
    %v131 = vpop.permute.xlu0 %130
    %134 = vset.pattern.permute.xlu0 0
    %135 = vperm.xlu0 %134, %v56
    %v136 = vpop.permute.xlu0 %135
    %v139 = vlaneseq
    %v140 = vshrl.u32 %v139, 7
    %v141 = vsub.s32 0, %v140
    %v142 = vrot.slane %v57, %v141
    %v144 = vadd.f32 %v61, %v142
    %v145 = vadd.f32 %v66, %v142
    %v146 = vadd.f32 %v71, %v142
    %v147 = vadd.f32 %v76, %v142
    %v148 = vadd.f32 %v81, %v142
    %v149 = vadd.f32 %v86, %v142
    %v150 = vadd.f32 %v91, %v142
    %v151 = vadd.f32 %v96, %v142
    %v152 = vadd.f32 %v101, %v142
    %v153 = vadd.f32 %v106, %v142
    %v154 = vadd.f32 %v111, %v142
    %v155 = vadd.f32 %v116, %v142
    %v156 = vadd.f32 %v121, %v142
    %v157 = vadd.f32 %v126, %v142
    %v158 = vadd.f32 %v131, %v142
    %v159 = vadd.f32 %v136, %v142
    %v160 = vtanh.pop %v144
    %v161 = vtanh.pop %v145
    %v162 = vtanh.pop %v146
    %v163 = vtanh.pop %v147
    %v164 = vtanh.pop %v148
    %v165 = vtanh.pop %v149
    %v166 = vtanh.pop %v150
    %v167 = vtanh.pop %v151
    %v168 = vtanh.pop %v152
    %v169 = vtanh.pop %v153
    %v170 = vtanh.pop %v154
    %v171 = vtanh.pop %v155
    %v172 = vtanh.pop %v156
    %v173 = vtanh.pop %v157
    %v174 = vtanh.pop %v158
    %v175 = vtanh.pop %v159
    %v176 = vld [vmem:[%s3] sm:$0xf]
    %v177 = vld [vmem:[%s3 + $0x4] sm:$0xf]
    %v178 = vld [vmem:[%s3 + $0x8] sm:$0xf]
    %v179 = vld [vmem:[%s3 + $0xc] sm:$0xf]
    %v180 = vld [vmem:[%s3 + $0x10] sm:$0xf]
    %v181 = vld [vmem:[%s3 + $0x14] sm:$0xf]
    %v182 = vld [vmem:[%s3 + $0x18] sm:$0xf]
    %v183 = vld [vmem:[%s3 + $0x1c] sm:$0xf]
    %v184 = vld [vmem:[%s3 + $0x20] sm:$0xf]
    %v185 = vld [vmem:[%s3 + $0x24] sm:$0xf]
    %v186 = vld [vmem:[%s3 + $0x28] sm:$0xf]
    %v187 = vld [vmem:[%s3 + $0x2c] sm:$0xf]
    %v188 = vld [vmem:[%s3 + $0x30] sm:$0xf]
    %v189 = vld [vmem:[%s3 + $0x34] sm:$0xf]
    %v190 = vld [vmem:[%s3 + $0x38] sm:$0xf]
    %v191 = vld [vmem:[%s3 + $0x3c] sm:$0xf]
    %v192 = vunpack.c.l.bf16 %v176
    %v193 = vunpack.c.l.bf16 %v177
    %v194 = vunpack.c.l.bf16 %v178
    %v195 = vunpack.c.l.bf16 %v179
    %v196 = vunpack.c.l.bf16 %v180
    %v197 = vunpack.c.l.bf16 %v181
    %v198 = vunpack.c.l.bf16 %v182
    %v199 = vunpack.c.l.bf16 %v183
    %v200 = vunpack.c.l.bf16 %v184
    %v201 = vunpack.c.l.bf16 %v185
    %v202 = vunpack.c.l.bf16 %v186
    %v203 = vunpack.c.l.bf16 %v187
    %v204 = vunpack.c.l.bf16 %v188
    %v205 = vunpack.c.l.bf16 %v189
    %v206 = vunpack.c.l.bf16 %v190
    %v207 = vunpack.c.l.bf16 %v191
    %v208 = vmul.f32 %v160, %v192
    %v209 = vmul.f32 %v161, %v193
    %v210 = vmul.f32 %v162, %v194
    %v211 = vmul.f32 %v163, %v195
    %v212 = vmul.f32 %v164, %v196
    %v213 = vmul.f32 %v165, %v197
    %v214 = vmul.f32 %v166, %v198
    %v215 = vmul.f32 %v167, %v199
    %v216 = vmul.f32 %v168, %v200
    %v217 = vmul.f32 %v169, %v201
    %v218 = vmul.f32 %v170, %v202
    %v219 = vmul.f32 %v171, %v203
    %v220 = vmul.f32 %v172, %v204
    %v221 = vmul.f32 %v173, %v205
    %v222 = vmul.f32 %v174, %v206
    %v223 = vmul.f32 %v175, %v207
    %v224 = vld [vmem:[#allocation2] sm:$0xff]
    %v225 = vld [vmem:[#allocation2 + $0x8] sm:$0xff]
    %v226 = vld [vmem:[#allocation2 + $0x10] sm:$0xff]
    %v227 = vld [vmem:[#allocation2 + $0x18] sm:$0xff]
    %v228 = vld [vmem:[#allocation2 + $0x20] sm:$0xff]
    %v229 = vld [vmem:[#allocation2 + $0x28] sm:$0xff]
    %v230 = vld [vmem:[#allocation2 + $0x30] sm:$0xff]
    %v231 = vld [vmem:[#allocation2 + $0x38] sm:$0xff]
    %v232 = vld [vmem:[#allocation2 + $0x40] sm:$0xff]
    %v233 = vld [vmem:[#allocation2 + $0x48] sm:$0xff]
    %v234 = vld [vmem:[#allocation2 + $0x50] sm:$0xff]
    %v235 = vld [vmem:[#allocation2 + $0x58] sm:$0xff]
    %v236 = vld [vmem:[#allocation2 + $0x60] sm:$0xff]
    %v237 = vld [vmem:[#allocation2 + $0x68] sm:$0xff]
    %v238 = vld [vmem:[#allocation2 + $0x70] sm:$0xff]
    %v239 = vld [vmem:[#allocation2 + $0x78] sm:$0xff]
    %v240 = vld [vmem:[%s4] sm:$0xff]
    %v241 = vld [vmem:[%s4 + $0x8] sm:$0xff]
    %v242 = vld [vmem:[%s4 + $0x10] sm:$0xff]
    %v243 = vld [vmem:[%s4 + $0x18] sm:$0xff]
    %v244 = vld [vmem:[%s4 + $0x20] sm:$0xff]
    %v245 = vld [vmem:[%s4 + $0x28] sm:$0xff]
    %v246 = vld [vmem:[%s4 + $0x30] sm:$0xff]
    %v247 = vld [vmem:[%s4 + $0x38] sm:$0xff]
    %v248 = vld [vmem:[%s4 + $0x40] sm:$0xff]
    %v249 = vld [vmem:[%s4 + $0x48] sm:$0xff]
    %v250 = vld [vmem:[%s4 + $0x50] sm:$0xff]
    %v251 = vld [vmem:[%s4 + $0x58] sm:$0xff]
    %v252 = vld [vmem:[%s4 + $0x60] sm:$0xff]
    %v253 = vld [vmem:[%s4 + $0x68] sm:$0xff]
    %v254 = vld [vmem:[%s4 + $0x70] sm:$0xff]
    %v255 = vld [vmem:[%s4 + $0x78] sm:$0xff]
    %256 = vmatprep.subr.mxu0 0.0
    %257 = vmatpush1.msra.mxu0 %v240
    %258 = vmatprep.subr.mxu0 0.0
    %259 = vmatpush1.msra.mxu0 %v241
    %260 = vmatprep.subr.mxu0 0.0
    %261 = vmatpush1.msra.mxu0 %v242
    %262 = vmatprep.subr.mxu0 0.0
    %263 = vmatpush1.msra.mxu0 %v243
    %264 = vmatprep.subr.mxu0 0.0
    %265 = vmatpush1.msra.mxu0 %v244
    %266 = vmatprep.subr.mxu0 0.0
    %267 = vmatpush1.msra.mxu0 %v245
    %268 = vmatprep.subr.mxu0 0.0
    %269 = vmatpush1.msra.mxu0 %v246
    %270 = vmatprep.subr.mxu0 0.0
    %271 = vmatpush1.msra.mxu0 %v247
    %272 = vmatprep.subr.mxu0 0.0
    %273 = vmatpush1.msra.mxu0 %v248
    %274 = vmatprep.subr.mxu0 0.0
    %275 = vmatpush1.msra.mxu0 %v249
    %276 = vmatprep.subr.mxu0 0.0
    %277 = vmatpush1.msra.mxu0 %v250
    %278 = vmatprep.subr.mxu0 0.0
    %279 = vmatpush1.msra.mxu0 %v251
    %280 = vmatprep.subr.mxu0 0.0
    %281 = vmatpush1.msra.mxu0 %v252
    %282 = vmatprep.subr.mxu0 0.0
    %283 = vmatpush1.msra.mxu0 %v253
    %284 = vmatprep.subr.mxu0 0.0
    %285 = vmatpush1.msra.mxu0 %v254
    %286 = vmatprep.subr.mxu0 0.0
    %287 = vmatpush1.msra.mxu0 %v255
    %288 = vmatprep.subr.mxu0 0.0
    %289 = vmatpush1.msra.mxu0 0.0
    %290 = vmatprep.subr.mxu0 0.0
    %291 = vmatpush1.msra.mxu0 0.0
    %292 = vmatprep.subr.mxu0 0.0
    %293 = vmatpush1.msra.mxu0 0.0
    %294 = vmatprep.subr.mxu0 0.0
    %295 = vmatpush1.msra.mxu0 0.0
    %296 = vmatprep.subr.mxu0 0.0
    %297 = vmatpush1.msra.mxu0 0.0
    %298 = vmatprep.subr.mxu0 0.0
    %299 = vmatpush1.msra.mxu0 0.0
    %300 = vmatprep.subr.mxu0 0.0
    %301 = vmatpush1.msra.mxu0 0.0
    %302 = vmatprep.subr.mxu0 0.0
    %303 = vmatpush1.msra.mxu0 0.0
    %304 = vmatprep.subr.mxu0 0.0
    %305 = vmatpush1.msra.mxu0 0.0
    %306 = vmatprep.subr.mxu0 0.0
    %307 = vmatpush1.msra.mxu0 0.0
    %308 = vmatprep.subr.mxu0 0.0
    %309 = vmatpush1.msra.mxu0 0.0
    %310 = vmatprep.subr.mxu0 0.0
    %311 = vmatpush1.msra.mxu0 0.0
    %312 = vmatprep.subr.mxu0 0.0
    %313 = vmatpush1.msra.mxu0 0.0
    %314 = vmatprep.subr.mxu0 0.0
    %315 = vmatpush1.msra.mxu0 0.0
    %316 = vmatprep.subr.mxu0 0.0
    %317 = vmatpush1.msra.mxu0 0.0
    %318 = vmatprep.subr.mxu0 0.0
    %319 = vmatpush1.msra.mxu0 0.0
    %320 = vmatprep.mubr.f32.mxu0 0.0
    %321 = vmatmul.mubr.f32.gmra.mrb[0].mxu0 %v208
    %v322 = vpop.f32.mrb[0].mxu0
    %v323 = vadd.f32 0.0, %v322
    %v324 = vpop.f32.mrb[0].mxu0
    %325 = vmatprep.mubr.f32.mxu0 0.0
    %326 = vmatmul.mubr.f32.gmra.mrb[0].mxu0 %v209
    %v327 = vpop.f32.mrb[0].mxu0
    %v328 = vadd.f32 0.0, %v327
    %v329 = vpop.f32.mrb[0].mxu0
    %330 = vmatprep.mubr.f32.mxu0 0.0
    %331 = vmatmul.mubr.f32.gmra.mrb[0].mxu0 %v210
    %v332 = vpop.f32.mrb[0].mxu0
    %v333 = vadd.f32 0.0, %v332
    %v334 = vpop.f32.mrb[0].mxu0
    %335 = vmatprep.mubr.f32.mxu0 0.0
    %336 = vmatmul.mubr.f32.gmra.mrb[0].mxu0 %v211
    %v337 = vpop.f32.mrb[0].mxu0
    %v338 = vadd.f32 0.0, %v337
    %v339 = vpop.f32.mrb[0].mxu0
    %340 = vmatprep.mubr.f32.mxu0 0.0
    %341 = vmatmul.mubr.f32.gmra.mrb[0].mxu0 %v212
    %v342 = vpop.f32.mrb[0].mxu0
    %v343 = vadd.f32 0.0, %v342
    %v344 = vpop.f32.mrb[0].mxu0
    %345 = vmatprep.mubr.f32.mxu0 0.0
    %346 = vmatmul.mubr.f32.gmra.mrb[0].mxu0 %v213
    %v347 = vpop.f32.mrb[0].mxu0
    %v348 = vadd.f32 0.0, %v347
    %v349 = vpop.f32.mrb[0].mxu0
    %350 = vmatprep.mubr.f32.mxu0 0.0
    %351 = vmatmul.mubr.f32.gmra.mrb[0].mxu0 %v214
    %v352 = vpop.f32.mrb[0].mxu0
    %v353 = vadd.f32 0.0, %v352
    %v354 = vpop.f32.mrb[0].mxu0
    %355 = vmatprep.mubr.f32.mxu0 0.0
    %356 = vmatmul.mubr.f32.gmra.mrb[0].mxu0 %v215
    %v357 = vpop.f32.mrb[0].mxu0
    %v358 = vadd.f32 0.0, %v357
    %v359 = vpop.f32.mrb[0].mxu0
    %360 = vmatprep.mubr.f32.mxu0 0.0
    %361 = vmatmul.mubr.f32.gmra.mrb[0].mxu0 %v216
    %v362 = vpop.f32.mrb[0].mxu0
    %v363 = vadd.f32 0.0, %v362
    %v364 = vpop.f32.mrb[0].mxu0
    %365 = vmatprep.mubr.f32.mxu0 0.0
    %366 = vmatmul.mubr.f32.gmra.mrb[0].mxu0 %v217
    %v367 = vpop.f32.mrb[0].mxu0
    %v368 = vadd.f32 0.0, %v367
    %v369 = vpop.f32.mrb[0].mxu0
    %370 = vmatprep.mubr.f32.mxu0 0.0
    %371 = vmatmul.mubr.f32.gmra.mrb[0].mxu0 %v218
    %v372 = vpop.f32.mrb[0].mxu0
    %v373 = vadd.f32 0.0, %v372
    %v374 = vpop.f32.mrb[0].mxu0
    %375 = vmatprep.mubr.f32.mxu0 0.0
    %376 = vmatmul.mubr.f32.gmra.mrb[0].mxu0 %v219
    %v377 = vpop.f32.mrb[0].mxu0
    %v378 = vadd.f32 0.0, %v377
    %v379 = vpop.f32.mrb[0].mxu0
    %380 = vmatprep.mubr.f32.mxu0 0.0
    %381 = vmatmul.mubr.f32.gmra.mrb[0].mxu0 %v220
    %v382 = vpop.f32.mrb[0].mxu0
    %v383 = vadd.f32 0.0, %v382
    %v384 = vpop.f32.mrb[0].mxu0
    %385 = vmatprep.mubr.f32.mxu0 0.0
    %386 = vmatmul.mubr.f32.gmra.mrb[0].mxu0 %v221
    %v387 = vpop.f32.mrb[0].mxu0
    %v388 = vadd.f32 0.0, %v387
    %v389 = vpop.f32.mrb[0].mxu0
    %390 = vmatprep.mubr.f32.mxu0 0.0
    %391 = vmatmul.mubr.f32.gmra.mrb[0].mxu0 %v222
    %v392 = vpop.f32.mrb[0].mxu0
    %v393 = vadd.f32 0.0, %v392
    %v394 = vpop.f32.mrb[0].mxu0
    %395 = vmatprep.mubr.f32.mxu0 0.0
    %396 = vmatmul.mubr.f32.gmra.mrb[0].mxu0 %v223
    %v397 = vpop.f32.mrb[0].mxu0
    %v398 = vadd.f32 0.0, %v397
    %v399 = vpop.f32.mrb[0].mxu0
    %400 = vdwg.mxu0
    %v401 = vadd.f32 %v224, %v323
    %v402 = vadd.f32 %v225, %v328
    %v403 = vadd.f32 %v226, %v333
    %v404 = vadd.f32 %v227, %v338
    %v405 = vadd.f32 %v228, %v343
    %v406 = vadd.f32 %v229, %v348
    %v407 = vadd.f32 %v230, %v353
    %v408 = vadd.f32 %v231, %v358
    %v409 = vadd.f32 %v232, %v363
    %v410 = vadd.f32 %v233, %v368
    %v411 = vadd.f32 %v234, %v373
    %v412 = vadd.f32 %v235, %v378
    %v413 = vadd.f32 %v236, %v383
    %v414 = vadd.f32 %v237, %v388
    %v415 = vadd.f32 %v238, %v393
    %v416 = vadd.f32 %v239, %v398
    %417 = vst [vmem:[#allocation2] sm:$0xff] %v401
    %418 = vst [vmem:[#allocation2 + $0x8] sm:$0xff] %v402
    %419 = vst [vmem:[#allocation2 + $0x10] sm:$0xff] %v403
    %420 = vst [vmem:[#allocation2 + $0x18] sm:$0xff] %v404
    %421 = vst [vmem:[#allocation2 + $0x20] sm:$0xff] %v405
    %422 = vst [vmem:[#allocation2 + $0x28] sm:$0xff] %v406
    %423 = vst [vmem:[#allocation2 + $0x30] sm:$0xff] %v407
    %424 = vst [vmem:[#allocation2 + $0x38] sm:$0xff] %v408
    %425 = vst [vmem:[#allocation2 + $0x40] sm:$0xff] %v409
    %426 = vst [vmem:[#allocation2 + $0x48] sm:$0xff] %v410
    %427 = vst [vmem:[#allocation2 + $0x50] sm:$0xff] %v411
    %428 = vst [vmem:[#allocation2 + $0x58] sm:$0xff] %v412
    %429 = vst [vmem:[#allocation2 + $0x60] sm:$0xff] %v413
    %430 = vst [vmem:[#allocation2 + $0x68] sm:$0xff] %v414
    %431 = vst [vmem:[#allocation2 + $0x70] sm:$0xff] %v415
    %432 = vst [vmem:[#allocation2 + $0x78] sm:$0xff] %v416
    // Predicated region
    $region26: #{tpu_custom_call.1} parent=1 // pred_check
      %p433 = pneg %p21
    $region27: #{tpu_custom_call.1} parent=1 // pred_check_branch
      %435 = sbr.rel (%p433) target = $region29
    $region28: #{tpu_custom_call.1} parent=1 // pred_region
      %v436 = vld [vmem:[%s2] sm:$0xff]
      %v437 = vld [vmem:[%s2 + $0x8] sm:$0xff]
      %v438 = vld [vmem:[%s2 + $0x10] sm:$0xff]
      %v439 = vld [vmem:[%s2 + $0x18] sm:$0xff]
      %v440 = vld [vmem:[%s2 + $0x20] sm:$0xff]
      %v441 = vld [vmem:[%s2 + $0x28] sm:$0xff]
      %v442 = vld [vmem:[%s2 + $0x30] sm:$0xff]
      %v443 = vld [vmem:[%s2 + $0x38] sm:$0xff]
      %v444 = vld [vmem:[%s2 + $0x40] sm:$0xff]
      %v445 = vld [vmem:[%s2 + $0x48] sm:$0xff]
      %v446 = vld [vmem:[%s2 + $0x50] sm:$0xff]
      %v447 = vld [vmem:[%s2 + $0x58] sm:$0xff]
      %v448 = vld [vmem:[%s2 + $0x60] sm:$0xff]
      %v449 = vld [vmem:[%s2 + $0x68] sm:$0xff]
      %v450 = vld [vmem:[%s2 + $0x70] sm:$0xff]
      %v451 = vld [vmem:[%s2 + $0x78] sm:$0xff]
      %v452 = vld [vmem:[#allocation2] sm:$0xff]
      %v453 = vld [vmem:[#allocation2 + $0x8] sm:$0xff]
      %v454 = vld [vmem:[#allocation2 + $0x10] sm:$0xff]
      %v455 = vld [vmem:[#allocation2 + $0x18] sm:$0xff]
      %v456 = vld [vmem:[#allocation2 + $0x20] sm:$0xff]
      %v457 = vld [vmem:[#allocation2 + $0x28] sm:$0xff]
      %v458 = vld [vmem:[#allocation2 + $0x30] sm:$0xff]
      %v459 = vld [vmem:[#allocation2 + $0x38] sm:$0xff]
      %v460 = vld [vmem:[#allocation2 + $0x40] sm:$0xff]
      %v461 = vld [vmem:[#allocation2 + $0x48] sm:$0xff]
      %v462 = vld [vmem:[#allocation2 + $0x50] sm:$0xff]
      %v463 = vld [vmem:[#allocation2 + $0x58] sm:$0xff]
      %v464 = vld [vmem:[#allocation2 + $0x60] sm:$0xff]
      %v465 = vld [vmem:[#allocation2 + $0x68] sm:$0xff]
      %v466 = vld [vmem:[#allocation2 + $0x70] sm:$0xff]
      %v467 = vld [vmem:[#allocation2 + $0x78] sm:$0xff]
      %469 = vset.pattern.permute.xlu0 0
      %470 = vperm.xlu0 %469, %v436
      %v471 = vpop.permute.xlu0 %470
      %474 = vset.pattern.permute.xlu0 0
      %475 = vperm.xlu0 %474, %v437
      %v476 = vpop.permute.xlu0 %475
      %479 = vset.pattern.permute.xlu0 0
      %480 = vperm.xlu0 %479, %v438
      %v481 = vpop.permute.xlu0 %480
      %484 = vset.pattern.permute.xlu0 0
      %485 = vperm.xlu0 %484, %v439
      %v486 = vpop.permute.xlu0 %485
      %489 = vset.pattern.permute.xlu0 0
      %490 = vperm.xlu0 %489, %v440
      %v491 = vpop.permute.xlu0 %490
      %494 = vset.pattern.permute.xlu0 0
      %495 = vperm.xlu0 %494, %v441
      %v496 = vpop.permute.xlu0 %495
      %499 = vset.pattern.permute.xlu0 0
      %500 = vperm.xlu0 %499, %v442
      %v501 = vpop.permute.xlu0 %500
      %504 = vset.pattern.permute.xlu0 0
      %505 = vperm.xlu0 %504, %v443
      %v506 = vpop.permute.xlu0 %505
      %509 = vset.pattern.permute.xlu0 0
      %510 = vperm.xlu0 %509, %v444
      %v511 = vpop.permute.xlu0 %510
      %514 = vset.pattern.permute.xlu0 0
      %515 = vperm.xlu0 %514, %v445
      %v516 = vpop.permute.xlu0 %515
      %519 = vset.pattern.permute.xlu0 0
      %520 = vperm.xlu0 %519, %v446
      %v521 = vpop.permute.xlu0 %520
      %524 = vset.pattern.permute.xlu0 0
      %525 = vperm.xlu0 %524, %v447
      %v526 = vpop.permute.xlu0 %525
      %529 = vset.pattern.permute.xlu0 0
      %530 = vperm.xlu0 %529, %v448
      %v531 = vpop.permute.xlu0 %530
      %534 = vset.pattern.permute.xlu0 0
      %535 = vperm.xlu0 %534, %v449
      %v536 = vpop.permute.xlu0 %535
      %539 = vset.pattern.permute.xlu0 0
      %540 = vperm.xlu0 %539, %v450
      %v541 = vpop.permute.xlu0 %540
      %544 = vset.pattern.permute.xlu0 0
      %545 = vperm.xlu0 %544, %v451
      %v546 = vpop.permute.xlu0 %545
      %v548 = vmul.f32 %v471, %v452
      %v549 = vmul.f32 %v476, %v453
      %v550 = vmul.f32 %v481, %v454
      %v551 = vmul.f32 %v486, %v455
      %v552 = vmul.f32 %v491, %v456
      %v553 = vmul.f32 %v496, %v457
      %v554 = vmul.f32 %v501, %v458
      %v555 = vmul.f32 %v506, %v459
      %v556 = vmul.f32 %v511, %v460
      %v557 = vmul.f32 %v516, %v461
      %v558 = vmul.f32 %v521, %v462
      %v559 = vmul.f32 %v526, %v463
      %v560 = vmul.f32 %v531, %v464
      %v561 = vmul.f32 %v536, %v465
      %v562 = vmul.f32 %v541, %v466
      %v563 = vmul.f32 %v546, %v467
      %564 = vst [vmem:[#allocation3] sm:$0xff] %v548
      %565 = vst [vmem:[#allocation3 + $0x8] sm:$0xff] %v549
      %566 = vst [vmem:[#allocation3 + $0x10] sm:$0xff] %v550
      %567 = vst [vmem:[#allocation3 + $0x18] sm:$0xff] %v551
      %568 = vst [vmem:[#allocation3 + $0x20] sm:$0xff] %v552
      %569 = vst [vmem:[#allocation3 + $0x28] sm:$0xff] %v553
      %570 = vst [vmem:[#allocation3 + $0x30] sm:$0xff] %v554
      %571 = vst [vmem:[#allocation3 + $0x38] sm:$0xff] %v555
      %572 = vst [vmem:[#allocation3 + $0x40] sm:$0xff] %v556
      %573 = vst [vmem:[#allocation3 + $0x48] sm:$0xff] %v557
      %574 = vst [vmem:[#allocation3 + $0x50] sm:$0xff] %v558
      %575 = vst [vmem:[#allocation3 + $0x58] sm:$0xff] %v559
      %576 = vst [vmem:[#allocation3 + $0x60] sm:$0xff] %v560
      %577 = vst [vmem:[#allocation3 + $0x68] sm:$0xff] %v561
      %578 = vst [vmem:[#allocation3 + $0x70] sm:$0xff] %v562
      %579 = vst [vmem:[#allocation3 + $0x78] sm:$0xff] %v563
    $region29: #{tpu_custom_call.1} parent=1 // pred_fallthru
      _
    // Predicated region
    $region30: #{tpu_custom_call.1} parent=1 // pred_check
      _
    $region31: #{tpu_custom_call.1} parent=1 // pred_check_branch
      %581 = sbr.rel (0) target = $region33
    $region32: #{tpu_custom_call.1} parent=1 // pred_region
      %s583 = ssub.s32 2048, 2048
      %584 = vsyncadd [#allocation4], %s583
      %s585 = sshll.u32 [#allocation3], 4
      %s586 = int_to_ptr.vmem [resolvable:$true] %s585
      %591 = dma.vmem_to_hbm [thread:$0]  %s586, 2048, %s5, [#allocation4], 128, 128, 8
    $region33: #{tpu_custom_call.1} parent=1 // pred_fallthru
      _
    // Predicated region
    $region34: #{tpu_custom_call.1} parent=1 // pred_check
      _
    $region35: #{tpu_custom_call.1} parent=1 // pred_check_branch
      %593 = sbr.rel (0) target = $region37
    $region36: #{tpu_custom_call.1} parent=1 // pred_region
      %594 = dma.done [#allocation4], 2048
    $region37: #{tpu_custom_call.1} parent=1 // pred_fallthru
      _
    %595 = vsyncpa [#allocation4], 1

</llo_original>
